<compile_context>
chip_gen: v7x
topology: tpu7x:2x2x1
jax: 0.10.0
libtpu: 0.0.40
codegen_flags: <defaults>
</compile_context>

<pallas_src>
import jax
import jax.numpy as jnp
from jax.experimental import pallas as pl
from jax.experimental.pallas import tpu as pltpu

OBS_DIM = 4        # CartPole-v1 observation dim
ACT_DIM = 2        # CartPole-v1 action dim
HIDDEN = 128
LANE = 128         # lane-dense padded head output width
PACK = 8           # obs packed width (4 obs + 1 ones col + 3 zero pad)
SUBLANE = 8
MAX_BLOCK_B = 512  # default batch tile


def actor_critic_kernel(obs_ref, l1_ref, wh_ref, bh_ref, out_ref):
    """Fused shared layer + actor/critic heads (one batch tile).

    obs_ref : (Bt, PACK)      f32, cols 0:4 = obs, col 4 = 1.0, cols 5:8 = 0
    l1_ref  : (PACK, HIDDEN)  f32, rows 0:4 = W1^T, row 4 = b1, rows 5:8 = 0
    wh_ref  : (HIDDEN, LANE)  bf16, cols 0:2 = Wa^T, col 2 = Wc^T, rest = 0
    bh_ref  : (SUBLANE, LANE) f32, row 0 = [ba | bc | 0], rest = 0
    out_ref : (Bt, LANE)      f32, cols 0:2 = logits, col 2 = value, rest
                              cols zero; pad rows (if any) contain bias junk.
    """
    # Layer 1 on the MXU: K=8 matmul; the ones column picks up b1 for free.
    x = jnp.dot(obs_ref[...], l1_ref[...], preferred_element_type=jnp.float32)
    x = jnp.maximum(x, 0.0)                                    # (Bt, 128)

    # Fused actor+critic head: bf16 weights (MXU-native), f32 accumulation,
    # f32 bias added post-matmul.
    out = jnp.dot(x.astype(jnp.bfloat16), wh_ref[...],
                  preferred_element_type=jnp.float32)          # (Bt, 128)
    out_ref[...] = out + bh_ref[0:1, :]


def prepare_params(params):
    """One-time packing of PyTorch-layout params into three slabs.

    Returns (l1_slab f32 (8,128), head_w_slab bf16 (128,128),
             head_b_slab f32 (8,128)).  All padded entries are zero.
    """
    w1, b1, wa, ba, wc, bc = params

    l1 = jnp.zeros((PACK, HIDDEN), jnp.float32)
    l1 = l1.at[0:OBS_DIM, :].set(w1.T)             # W1^T : (4, 128)
    l1 = l1.at[OBS_DIM, :].set(b1)                 # b1   : (128,), hit by ones col

    wh = jnp.zeros((HIDDEN, LANE), jnp.float32)
    wh = wh.at[:, 0:ACT_DIM].set(wa.T)             # Wa^T : (128, 2)
    wh = wh.at[:, ACT_DIM:ACT_DIM + 1].set(wc.T)   # Wc^T : (128, 1)
    wh = wh.astype(jnp.bfloat16)                   # MXU-native weights

    bh = jnp.zeros((SUBLANE, LANE), jnp.float32)
    bh = bh.at[0, 0:ACT_DIM].set(ba)               # ba : (2,)
    bh = bh.at[0, ACT_DIM].set(bc[0])              # bc : (1,)
    return l1, wh, bh


def pack_obs(obs):
    """(B, OBS_DIM) f32 -> (B, PACK): [obs | 1 | 0 0 0].  Do this once per
    batch (e.g. when stacking vectorized-env observations)."""
    B = obs.shape[0]
    packed = jnp.zeros((B, PACK), jnp.float32)
    packed = packed.at[:, 0:OBS_DIM].set(obs.astype(jnp.float32))
    packed = packed.at[:, OBS_DIM].set(1.0)
    return packed


def actor_critic_forward(obs, l1_slab, wh_slab, bh_slab, *, block_b=None):
    """obs: (B, OBS_DIM) raw or (B, PACK) pre-packed observations.
    Returns (logits (B, ACT_DIM), value (B, 1)), both f32."""
    B = obs.shape[0]
    if obs.shape[1] == OBS_DIM:
        obs = pack_obs(obs)
    assert obs.shape[1] == PACK

    # Choose batch tile: whole batch (rounded to sublane) when small, else 512.
    if block_b is None:
        if B <= MAX_BLOCK_B:
            block_b = ((B + SUBLANE - 1) // SUBLANE) * SUBLANE
        else:
            block_b = MAX_BLOCK_B
    else:
        block_b = max(SUBLANE, ((block_b + SUBLANE - 1) // SUBLANE) * SUBLANE)

    Bp = ((B + block_b - 1) // block_b) * block_b
    if Bp != B:  # only pads when the caller did not align B to the tile
        obs = jnp.pad(obs, ((0, Bp - B), (0, 0)))

    grid = (Bp // block_b,)
    out = pl.pallas_call(
        actor_critic_kernel,
        out_shape=jax.ShapeDtypeStruct((Bp, LANE), jnp.float32),
        grid=grid,
        in_specs=[
            pl.BlockSpec((block_b, PACK), lambda i: (i, 0)),    # obs tile
            pl.BlockSpec((PACK, HIDDEN), lambda i: (0, 0)),     # l1 slab (resident)
            pl.BlockSpec((HIDDEN, LANE), lambda i: (0, 0)),     # head W (resident)
            pl.BlockSpec((SUBLANE, LANE), lambda i: (0, 0)),    # head b (resident)
        ],
        out_specs=pl.BlockSpec((block_b, LANE), lambda i: (i, 0)),
        compiler_params=pltpu.CompilerParams(
            dimension_semantics=("parallel",)),                 # megacore on v7x
    )(obs, l1_slab, wh_slab, bh_slab)

    logits = out[:B, :ACT_DIM]
    value = out[:B, ACT_DIM:ACT_DIM + 1]
    return logits, value


def init_params(key):
    """Deterministic init mimicking PyTorch Linear default (uniform +-1/sqrt(fan_in))."""
    k1, k2, k3, k4, k5, k6 = jax.random.split(key, 6)

    def lin(kw, kb, out_dim, in_dim):
        bound = 1.0 / jnp.sqrt(jnp.float32(in_dim))
        w = jax.random.uniform(kw, (out_dim, in_dim), jnp.float32, -bound, bound)
        b = jax.random.uniform(kb, (out_dim,), jnp.float32, -bound, bound)
        return w, b

    w1, b1 = lin(k1, k2, HIDDEN, OBS_DIM)    # shared Linear(obs_dim, 128)
    wa, ba = lin(k3, k4, ACT_DIM, HIDDEN)    # actor  Linear(128, act_dim)
    wc, bc = lin(k5, k6, 1, HIDDEN)          # critic Linear(128, 1)
    return (w1, b1, wa, ba, wc, bc)


def reference_forward(obs, params):
    w1, b1, wa, ba, wc, bc = params
    x = jnp.maximum(obs @ w1.T + b1, 0.0)
    logits = x @ wa.T + ba
    value = x @ wc.T + bc
    return logits, value


if __name__ == "__main__":
    key = jax.random.PRNGKey(0)
    kp, kx1, kx2 = jax.random.split(key, 3)

    params = init_params(kp)
    l1_slab, wh_slab, bh_slab = prepare_params(params)   # one-time packing

    # bf16 head weights => relax tolerance vs the f32 reference (per review).
    RTOL, ATOL = 1e-2, 1e-2

    # 1) tiny batch (single grid step, the overhead-bound regime)
    B1 = 8
    obs1 = jax.random.normal(kx1, (B1, OBS_DIM), dtype=jnp.float32)
    logits1, value1 = actor_critic_forward(obs1, l1_slab, wh_slab, bh_slab)
    jax.block_until_ready((logits1, value1))
    ref_l1, ref_v1 = reference_forward(obs1, params)
    assert logits1.shape == (B1, ACT_DIM) and value1.shape == (B1, 1)
    assert jnp.allclose(logits1, ref_l1, rtol=RTOL, atol=ATOL)
    assert jnp.allclose(value1, ref_v1, rtol=RTOL, atol=ATOL)

    # 2) small multi-tile batch to exercise the pipelined batch grid
    B2 = 24
    obs2 = jax.random.normal(kx2, (B2, OBS_DIM), dtype=jnp.float32)
    logits2, value2 = actor_critic_forward(obs2, l1_slab, wh_slab, bh_slab,
                                           block_b=8)   # grid = (3,)
    jax.block_until_ready((logits2, value2))
    ref_l2, ref_v2 = reference_forward(obs2, params)
    assert logits2.shape == (B2, ACT_DIM) and value2.shape == (B2, 1)
    assert jnp.allclose(logits2, ref_l2, rtol=RTOL, atol=ATOL)
    assert jnp.allclose(value2, ref_v2, rtol=RTOL, atol=ATOL)

    print("KERNEL_OK")
</pallas_src>

<mosaic_0001>
module attributes {stable_mosaic.version = 11 : i64} {
  func.func @actor_critic_kernel(%arg0: i32, %arg1: memref<8x8xf32, #tpu.memory_space<vmem>>, %arg2: memref<8x128xf32, #tpu.memory_space<vmem>>, %arg3: memref<128x128xbf16, #tpu.memory_space<vmem>>, %arg4: memref<8x128xf32, #tpu.memory_space<vmem>>, %arg5: memref<8x128xf32, #tpu.memory_space<vmem>>) attributes {dimension_semantics = [#tpu.dimension_semantics<parallel>], iteration_bounds = array<i64: 1>, scalar_prefetch = 0 : i64, scratch_operands = 0 : i64, tpu.core_type = #tpu.core_type<tc>, window_params = [{transform_indices = @transform_0, window_bounds = array<i64: 8, 8>}, {pipeline_mode = #tpu.pipeline_mode<synchronous>, transform_indices = @transform_1, window_bounds = array<i64: 8, 128>}, {pipeline_mode = #tpu.pipeline_mode<synchronous>, transform_indices = @transform_2, window_bounds = array<i64: 128, 128>}, {pipeline_mode = #tpu.pipeline_mode<synchronous>, transform_indices = @transform_3, window_bounds = array<i64: 8, 128>}, {transform_indices = @transform_4, window_bounds = array<i64: 8, 128>}]} {
    %c0 = arith.constant 0 : index
    %c0_0 = arith.constant 0 : index
    %0 = vector.load %arg1[%c0, %c0_0] : memref<8x8xf32, #tpu.memory_space<vmem>>, vector<8x8xf32>
    %c0_1 = arith.constant 0 : index
    %c0_2 = arith.constant 0 : index
    %1 = vector.load %arg2[%c0_1, %c0_2] : memref<8x128xf32, #tpu.memory_space<vmem>>, vector<8x128xf32>
    %cst = arith.constant dense<0.000000e+00> : vector<8x128xf32>
    %2 = tpu.matmul %0, %1, %cst {dimension_numbers = #tpu.dot_dimension_numbers<[1], [0], [0], [1], [0, 0, 1, 1], [], []>} : vector<8x8xf32>, vector<8x128xf32>, vector<8x128xf32> -> vector<8x128xf32>
    %cst_3 = arith.constant 0.000000e+00 : f32
    %3 = vector.broadcast %cst_3 : f32 to vector<8x128xf32>
    %4 = arith.maximumf %2, %3 : vector<8x128xf32>
    %5 = arith.truncf %4 : vector<8x128xf32> to vector<8x128xbf16>
    %c0_4 = arith.constant 0 : index
    %c0_5 = arith.constant 0 : index
    %6 = vector.load %arg3[%c0_4, %c0_5] : memref<128x128xbf16, #tpu.memory_space<vmem>>, vector<128x128xbf16>
    %cst_6 = arith.constant dense<0.000000e+00> : vector<8x128xf32>
    %7 = tpu.matmul %5, %6, %cst_6 {dimension_numbers = #tpu.dot_dimension_numbers<[1], [0], [0], [1], [0, 0, 1, 1], [], []>} : vector<8x128xbf16>, vector<128x128xbf16>, vector<8x128xf32> -> vector<8x128xf32>
    %c0_7 = arith.constant 0 : index
    %c0_8 = arith.constant 0 : index
    %8 = vector.load %arg4[%c0_7, %c0_8] : memref<8x128xf32, #tpu.memory_space<vmem>>, vector<1x128xf32>
    %9 = vector.broadcast %8 : vector<1x128xf32> to vector<8x128xf32>
    %10 = arith.addf %7, %9 : vector<8x128xf32>
    %c0_9 = arith.constant 0 : index
    %c0_10 = arith.constant 0 : index
    %11 = vector.load %arg5[%c0_9, %c0_10] : memref<8x128xf32, #tpu.memory_space<vmem>>, vector<8x128xf32>
    tpu.vector_store %arg5[%c0_9, %c0_10], %10 {strides = array<i32>} : memref<8x128xf32, #tpu.memory_space<vmem>>, vector<8x128xf32>,
    return
  }
  func.func @transform_0(%arg0: i32) -> (i32, i32) {
    %c0_i32 = arith.constant 0 : i32
    %c0_i32_0 = arith.constant 0 : i32
    return %arg0, %c0_i32 : i32, i32
  }
  func.func @transform_1(%arg0: i32) -> (i32, i32) {
    %c0_i32 = arith.constant 0 : i32
    %c0_i32_0 = arith.constant 0 : i32
    %c0_i32_1 = arith.constant 0 : i32
    return %c0_i32, %c0_i32_0 : i32, i32
  }
  func.func @transform_2(%arg0: i32) -> (i32, i32) {
    %c0_i32 = arith.constant 0 : i32
    %c0_i32_0 = arith.constant 0 : i32
    %c0_i32_1 = arith.constant 0 : i32
    return %c0_i32, %c0_i32_0 : i32, i32
  }
  func.func @transform_3(%arg0: i32) -> (i32, i32) {
    %c0_i32 = arith.constant 0 : i32
    %c0_i32_0 = arith.constant 0 : i32
    %c0_i32_1 = arith.constant 0 : i32
    return %c0_i32, %c0_i32_0 : i32, i32
  }
  func.func @transform_4(%arg0: i32) -> (i32, i32) {
    %c0_i32 = arith.constant 0 : i32
    %c0_i32_0 = arith.constant 0 : i32
    return %arg0, %c0_i32 : i32, i32
  }
}

</mosaic_0001>

<llo_original>
// kernel: tpu_custom_call.1
$region0: #{tpu_custom_call.1}
  #allocation0 [shape = 'u32[]', space=smem, size = 0x4, offset = 0x4, fixed_abs, tag = 'smem constant byte address 0x4 - core index']
  #allocation1 [shape = 'u32[144,128]{1,0:T(1,128)}', space=vmem, size = 0x12000, scoped, tag = 'internal scratch']
  %s0 = inlined_call_operand.hbm [shape: f32[8,8], index: 0, kind: input, shape index: {}]
  %s1 = inlined_call_operand.hbm [shape: f32[8,128], index: 1, kind: input, shape index: {}]
  %s2 = inlined_call_operand.hbm [shape: bf16[128,128], index: 2, kind: input, shape index: {}]
  %s3 = inlined_call_operand.vmem [shape: f32[8,128], index: 3, kind: input, shape index: {}]
  %s4 = inlined_call_operand.hbm [shape: f32[8,128], index: 4, kind: output, shape index: {}]
  %s5 = sld [smem:[#allocation0]]
  $region38: #{tpu_custom_call.1} parent=0
    _
  %s7 = ssub.s32 1, %s5
  %s8 = scalar_select 0, %s7, %s5
  $region1: #{tpu_custom_call.1} parent=0
    #allocation2 [shape = 'u8[4096]{0}', space=vmem, size = 0x1000, scoped, tag = 'input window, operand 0, single buffered']
    #allocation3 [shape = 's32[1]{0}', space=sflag, size = 0x4, scoped, tag = 'scoped memory for tpu_custom_call.1']
    #allocation4 [shape = 's32[1]{0}', space=sflag, size = 0x4, scoped, tag = 'scoped memory for tpu_custom_call.1']
    #allocation5 [shape = 'u8[4096]{0}', space=vmem, size = 0x1000, scoped, tag = 'input window, operand 1, single buffered']
    #allocation6 [shape = 's32[1]{0}', space=sflag, size = 0x4, scoped, tag = 'scoped memory for tpu_custom_call.1']
    #allocation7 [shape = 'u8[32768]{0}', space=vmem, size = 0x8000, scoped, tag = 'input window, operand 2, single buffered']
    #allocation8 [shape = 'u8[4096]{0}', space=vmem, size = 0x1000, scoped, tag = 'output window, operand 0, single buffered']
    %9 = vsyncpa [#allocation3], 0
    %10 = vsyncpa [#allocation6], 0
    %11 = vsyncpa [#allocation4], 0
    // Predicated region
    $region2: #{tpu_custom_call.1} parent=1 // pred_check
      _
    $region3: #{tpu_custom_call.1} parent=1 // pred_check_branch
      %13 = sbr.rel (0) target = $region5
    $region4: #{tpu_custom_call.1} parent=1 // pred_region
      %s15 = ssub.s32 128, 128
      %16 = vsyncadd [#allocation3], %s15
      %s18 = sshll.u32 [#allocation2], 4
      %s19 = int_to_ptr.vmem [resolvable:$true] %s18
      %21 = dma.hbm_to_vmem [thread:$0]  %s0, 128, %s19, [#allocation3]
    $region5: #{tpu_custom_call.1} parent=1 // pred_fallthru
      _
    // Predicated region
    $region6: #{tpu_custom_call.1} parent=1 // pred_check
      _
    $region7: #{tpu_custom_call.1} parent=1 // pred_check_branch
      %23 = sbr.rel (0) target = $region9
    $region8: #{tpu_custom_call.1} parent=1 // pred_region
      %s25 = ssub.s32 128, 128
      %26 = vsyncadd [#allocation6], %s25
      %s28 = sshll.u32 [#allocation5], 4
      %s29 = int_to_ptr.vmem [resolvable:$true] %s28
      %31 = dma.hbm_to_vmem [thread:$0]  %s1, 128, %s29, [#allocation6]
    $region9: #{tpu_custom_call.1} parent=1 // pred_fallthru
      _
    // Predicated region
    $region10: #{tpu_custom_call.1} parent=1 // pred_check
      _
    $region11: #{tpu_custom_call.1} parent=1 // pred_check_branch
      %33 = sbr.rel (0) target = $region13
    $region12: #{tpu_custom_call.1} parent=1 // pred_region
      %s35 = ssub.s32 1024, 1024
      %36 = vsyncadd [#allocation6], %s35
      %s37 = sshll.u32 [#allocation7], 4
      %s38 = int_to_ptr.vmem [resolvable:$true] %s37
      %43 = dma.hbm_to_vmem [thread:$0]  %s2, 1024, %s38, [#allocation6], 64, 64, 4
    $region13: #{tpu_custom_call.1} parent=1 // pred_fallthru
      _
    // Predicated region
    $region14: #{tpu_custom_call.1} parent=1 // pred_check
      _
    $region15: #{tpu_custom_call.1} parent=1 // pred_check_branch
      %45 = sbr.rel (0) target = $region17
    $region16: #{tpu_custom_call.1} parent=1 // pred_region
      _
    $region17: #{tpu_custom_call.1} parent=1 // pred_fallthru
      _
    // Predicated region
    $region18: #{tpu_custom_call.1} parent=1 // pred_check
      _
    $region19: #{tpu_custom_call.1} parent=1 // pred_check_branch
      %47 = sbr.rel (0) target = $region21
    $region20: #{tpu_custom_call.1} parent=1 // pred_region
      %48 = dma.done [#allocation3], 128
    $region21: #{tpu_custom_call.1} parent=1 // pred_fallthru
      _
    // Predicated region
    $region22: #{tpu_custom_call.1} parent=1 // pred_check
      _
    $region23: #{tpu_custom_call.1} parent=1 // pred_check_branch
      %50 = sbr.rel (0) target = $region25
    $region24: #{tpu_custom_call.1} parent=1 // pred_region
      %51 = dma.done [#allocation6], 128
    $region25: #{tpu_custom_call.1} parent=1 // pred_fallthru
      _
    // Predicated region
    $region26: #{tpu_custom_call.1} parent=1 // pred_check
      _
    $region27: #{tpu_custom_call.1} parent=1 // pred_check_branch
      %53 = sbr.rel (0) target = $region29
    $region28: #{tpu_custom_call.1} parent=1 // pred_region
      %54 = dma.done [#allocation6], 1024
    $region29: #{tpu_custom_call.1} parent=1 // pred_fallthru
      _
    %v56 = vld [vmem:[#allocation2] sm:$0xff]
    %v57 = vld [vmem:[#allocation5] sm:$0xff]
    %vm58 = vcmask 64512
    %v60 = vsel %vm58, %v56, 0
    %62 = vmatprep.subr.mxu0 0.0
    %63 = vmatpush1.msra.mxu0 %v57
    %64 = vmatprep.subr.mxu0 0.0
    %65 = vmatpush1.msra.mxu0 0.0
    %66 = vmatprep.subr.mxu0 0.0
    %67 = vmatpush1.msra.mxu0 0.0
    %68 = vmatprep.subr.mxu0 0.0
    %69 = vmatpush1.msra.mxu0 0.0
    %70 = vmatprep.subr.mxu0 0.0
    %71 = vmatpush1.msra.mxu0 0.0
    %72 = vmatprep.subr.mxu0 0.0
    %73 = vmatpush1.msra.mxu0 0.0
    %74 = vmatprep.subr.mxu0 0.0
    %75 = vmatpush1.msra.mxu0 0.0
    %76 = vmatprep.subr.mxu0 0.0
    %77 = vmatpush1.msra.mxu0 0.0
    %78 = vmatprep.subr.mxu0 0.0
    %79 = vmatpush1.msra.mxu0 0.0
    %80 = vmatprep.subr.mxu0 0.0
    %81 = vmatpush1.msra.mxu0 0.0
    %82 = vmatprep.subr.mxu0 0.0
    %83 = vmatpush1.msra.mxu0 0.0
    %84 = vmatprep.subr.mxu0 0.0
    %85 = vmatpush1.msra.mxu0 0.0
    %86 = vmatprep.subr.mxu0 0.0
    %87 = vmatpush1.msra.mxu0 0.0
    %88 = vmatprep.subr.mxu0 0.0
    %89 = vmatpush1.msra.mxu0 0.0
    %90 = vmatprep.subr.mxu0 0.0
    %91 = vmatpush1.msra.mxu0 0.0
    %92 = vmatprep.subr.mxu0 0.0
    %93 = vmatpush1.msra.mxu0 0.0
    %94 = vmatprep.subr.mxu0 0.0
    %95 = vmatpush1.msra.mxu0 0.0
    %96 = vmatprep.subr.mxu0 0.0
    %97 = vmatpush1.msra.mxu0 0.0
    %98 = vmatprep.subr.mxu0 0.0
    %99 = vmatpush1.msra.mxu0 0.0
    %100 = vmatprep.subr.mxu0 0.0
    %101 = vmatpush1.msra.mxu0 0.0
    %102 = vmatprep.subr.mxu0 0.0
    %103 = vmatpush1.msra.mxu0 0.0
    %104 = vmatprep.subr.mxu0 0.0
    %105 = vmatpush1.msra.mxu0 0.0
    %106 = vmatprep.subr.mxu0 0.0
    %107 = vmatpush1.msra.mxu0 0.0
    %108 = vmatprep.subr.mxu0 0.0
    %109 = vmatpush1.msra.mxu0 0.0
    %110 = vmatprep.subr.mxu0 0.0
    %111 = vmatpush1.msra.mxu0 0.0
    %112 = vmatprep.subr.mxu0 0.0
    %113 = vmatpush1.msra.mxu0 0.0
    %114 = vmatprep.subr.mxu0 0.0
    %115 = vmatpush1.msra.mxu0 0.0
    %116 = vmatprep.subr.mxu0 0.0
    %117 = vmatpush1.msra.mxu0 0.0
    %118 = vmatprep.subr.mxu0 0.0
    %119 = vmatpush1.msra.mxu0 0.0
    %120 = vmatprep.subr.mxu0 0.0
    %121 = vmatpush1.msra.mxu0 0.0
    %122 = vmatprep.subr.mxu0 0.0
    %123 = vmatpush1.msra.mxu0 0.0
    %124 = vmatprep.subr.mxu0 0.0
    %125 = vmatpush1.msra.mxu0 0.0
    %126 = vmatprep.mubr.f32.mxu0 0.0
    %127 = vmatmul.mubr.f32.gmra.mrb[0].mxu0 %v60
    %v128 = vpop.f32.mrb[0].mxu0
    %v129 = vadd.f32 0.0, %v128
    %v130 = vpop.f32.mrb[0].mxu0
    %131 = vdwg.mxu0
    %v132 = vmax.f32 %v129, 0.0
    %v133 = vpack.c.bf16 %v132, %v132
    %v134 = vld [vmem:[#allocation7] sm:$0xf]
    %v135 = vld [vmem:[#allocation7 + $0x4] sm:$0xf]
    %v136 = vld [vmem:[#allocation7 + $0x8] sm:$0xf]
    %v137 = vld [vmem:[#allocation7 + $0xc] sm:$0xf]
    %v138 = vld [vmem:[#allocation7 + $0x10] sm:$0xf]
    %v139 = vld [vmem:[#allocation7 + $0x14] sm:$0xf]
    %v140 = vld [vmem:[#allocation7 + $0x18] sm:$0xf]
    %v141 = vld [vmem:[#allocation7 + $0x1c] sm:$0xf]
    %v142 = vld [vmem:[#allocation7 + $0x20] sm:$0xf]
    %v143 = vld [vmem:[#allocation7 + $0x24] sm:$0xf]
    %v144 = vld [vmem:[#allocation7 + $0x28] sm:$0xf]
    %v145 = vld [vmem:[#allocation7 + $0x2c] sm:$0xf]
    %v146 = vld [vmem:[#allocation7 + $0x30] sm:$0xf]
    %v147 = vld [vmem:[#allocation7 + $0x34] sm:$0xf]
    %v148 = vld [vmem:[#allocation7 + $0x38] sm:$0xf]
    %v149 = vld [vmem:[#allocation7 + $0x3c] sm:$0xf]
    %v150 = vld [vmem:[%s3] sm:$0x1]
    %v151 = vlaneseq
    %v152 = vshrl.u32 %v151, 7
    %v153 = vsub.s32 0, %v152
    %v154 = vrot.slane %v150, %v153
    %v171 = vunpack.c.l.b16 %v134
    %v172 = vunpack.c.l.b16 %v135
    %v173 = vunpack.c.l.b16 %v136
    %v174 = vunpack.c.l.b16 %v137
    %v175 = vunpack.c.l.b16 %v138
    %v176 = vunpack.c.l.b16 %v139
    %v177 = vunpack.c.l.b16 %v140
    %v178 = vunpack.c.l.b16 %v141
    %v179 = vunpack.c.l.b16 %v142
    %v180 = vunpack.c.l.b16 %v143
    %v181 = vunpack.c.l.b16 %v144
    %v182 = vunpack.c.l.b16 %v145
    %v183 = vunpack.c.l.b16 %v146
    %v184 = vunpack.c.l.b16 %v147
    %v185 = vunpack.c.l.b16 %v148
    %v186 = vunpack.c.l.b16 %v149
    %v187 = vpack.c.b16 %v172, %v171
    %v188 = vpack.c.b16 %v174, %v173
    %v189 = vpack.c.b16 %v176, %v175
    %v190 = vpack.c.b16 %v178, %v177
    %v191 = vpack.c.b16 %v180, %v179
    %v192 = vpack.c.b16 %v182, %v181
    %v193 = vpack.c.b16 %v184, %v183
    %v194 = vpack.c.b16 %v186, %v185
    %203 = vmatprep.subr.bf16.mxu0 0
    %204 = vmatpush1.bf16.msra.mxu0 %v187
    %205 = vmatprep.subr.bf16.mxu0 0
    %206 = vmatpush1.bf16.msra.mxu0 %v188
    %207 = vmatprep.subr.bf16.mxu0 0
    %208 = vmatpush1.bf16.msra.mxu0 %v189
    %209 = vmatprep.subr.bf16.mxu0 0
    %210 = vmatpush1.bf16.msra.mxu0 %v190
    %211 = vmatprep.subr.bf16.mxu0 0
    %212 = vmatpush1.bf16.msra.mxu0 %v191
    %213 = vmatprep.subr.bf16.mxu0 0
    %214 = vmatpush1.bf16.msra.mxu0 %v192
    %215 = vmatprep.subr.bf16.mxu0 0
    %216 = vmatpush1.bf16.msra.mxu0 %v193
    %217 = vmatprep.subr.bf16.mxu0 0
    %218 = vmatpush1.bf16.msra.mxu0 %v194
    %219 = vmatprep.subr.bf16.mxu0 0
    %220 = vmatpush1.bf16.msra.mxu0 0
    %221 = vmatprep.subr.bf16.mxu0 0
    %222 = vmatpush1.bf16.msra.mxu0 0
    %223 = vmatprep.subr.bf16.mxu0 0
    %224 = vmatpush1.bf16.msra.mxu0 0
    %225 = vmatprep.subr.bf16.mxu0 0
    %226 = vmatpush1.bf16.msra.mxu0 0
    %227 = vmatprep.subr.bf16.mxu0 0
    %228 = vmatpush1.bf16.msra.mxu0 0
    %229 = vmatprep.subr.bf16.mxu0 0
    %230 = vmatpush1.bf16.msra.mxu0 0
    %231 = vmatprep.subr.bf16.mxu0 0
    %232 = vmatpush1.bf16.msra.mxu0 0
    %233 = vmatprep.subr.bf16.mxu0 0
    %234 = vmatpush1.bf16.msra.mxu0 0
    %235 = vmatprep.mubr.bf16.mxu0 0
    %236 = vmatmul.mubr.bf16.gmra.mrb[0].mxu0 %v133
    %v237 = vpop.f32.mrb[0].mxu0
    %v238 = vadd.f32 %v154, %v237
    %v239 = vpop.f32.mrb[0].mxu0
    %v240 = vpop.f32.mrb[0].mxu0
    %v241 = vpop.f32.mrb[0].mxu0
    %242 = vdwg.mxu0
    %243 = vst [vmem:[#allocation8] sm:$0xff] %v238
    // Predicated region
    $region30: #{tpu_custom_call.1} parent=1 // pred_check
      _
    $region31: #{tpu_custom_call.1} parent=1 // pred_check_branch
      %245 = sbr.rel (0) target = $region33
    $region32: #{tpu_custom_call.1} parent=1 // pred_region
      %s247 = ssub.s32 128, 128
      %248 = vsyncadd [#allocation4], %s247
      %s250 = sshll.u32 [#allocation8], 4
      %s251 = int_to_ptr.vmem [resolvable:$true] %s250
      %253 = dma.vmem_to_hbm [thread:$0]  %s251, 128, %s4, [#allocation4]
    $region33: #{tpu_custom_call.1} parent=1 // pred_fallthru
      _
    // Predicated region
    $region34: #{tpu_custom_call.1} parent=1 // pred_check
      _
    $region35: #{tpu_custom_call.1} parent=1 // pred_check_branch
      %255 = sbr.rel (0) target = $region37
    $region36: #{tpu_custom_call.1} parent=1 // pred_region
      %256 = dma.done [#allocation4], 128
    $region37: #{tpu_custom_call.1} parent=1 // pred_fallthru
      _
    %257 = vsyncpa [#allocation3], 1
    %258 = vsyncpa [#allocation6], 1
    %259 = vsyncpa [#allocation4], 1

</llo_original>
